<compile_context>
chip_gen: v6e
topology: v6e:2x2x1
jax: 0.10.0
libtpu: 0.0.40
codegen_flags: <defaults>
</compile_context>

<pallas_src>
import functools

import jax
import jax.numpy as jnp
from jax import lax
from jax.experimental import pallas as pl
from jax.experimental.pallas import tpu as pltpu


def _attention_kernel(*refs, use_mask):
    if use_mask:
        x_ref, w_ref, b_ref, m_ref, out_ref, a_ref = refs
    else:
        x_ref, w_ref, b_ref, out_ref, a_ref = refs
        m_ref = None

    tb, S, F = x_ref.shape

    x = x_ref[...]                                  # (tb, S, F), native dtype
    w = w_ref[...].astype(x.dtype)                  # (F, 1)

    # eij[b, s] = <x[b, s, :], weight>  -- MXU matmul (N=1 gets lane-padded),
    # f32 accumulate, highest precision so it matches the exact f32 reference.
    eij = jnp.dot(x.reshape(tb * S, F), w,
                  preferred_element_type=jnp.float32,
                  precision=lax.Precision.HIGHEST)           # (tb*S, 1)
    eij = eij.reshape(tb, S, 1) + b_ref[...].astype(jnp.float32)  # (tb, S, 1)

    c = jnp.exp(jnp.tanh(eij))                                # EUP, (tb, S, 1)
    if m_ref is not None:
        c = c * m_ref[...].astype(jnp.float32)                # (tb, S, 1)

    denom = jnp.sum(c, axis=1, keepdims=True)                 # (tb, 1, 1)
    a = c / denom + 1e-10                                     # exact divide

    # Weighted sum over the step dimension.  `a` broadcasts along the lane
    # axis (cheap); the bf16->f32 promotion of x happens inside the fused
    # multiply+reduce rather than as a long-lived block-sized copy.
    weighted = jnp.sum(x * a, axis=1)                         # (tb, F), f32

    out_ref[...] = weighted.astype(out_ref.dtype)             # lane-dense in F
    a_ref[...] = a.astype(a_ref.dtype)                        # (tb, S, 1)


def attention_forward(x, weight, bias=None, mask=None, *, tb=None,
                      x_block_budget_bytes=8 * 1024 * 1024):
    """x: (B, step_dim, feature_dim); weight: (feature_dim, 1); bias: (step_dim,).

    Returns (summed_weighted_input (B, F), attention_weights (B, S)).
    """
    B, S, F = x.shape
    itemsize = x.dtype.itemsize

    w_arr = jnp.asarray(weight, x.dtype).reshape(F, 1)
    if bias is None:
        bias = jnp.zeros((S,), x.dtype)
    b_arr = jnp.asarray(bias, x.dtype).reshape(1, S, 1)        # 3-D: no relayout

    # ---- batch-tile selection -------------------------------------------
    # Target an ~8 MiB x block (HBM-roofline sweet spot) but keep >=2 grid
    # blocks when possible so both v7x TensorCores get work.
    row_bytes = S * F * itemsize
    if tb is None:
        tb = max(1, int(x_block_budget_bytes) // max(int(row_bytes), 1))
        if B > 1:
            tb = min(tb, pl.cdiv(B, 2))
    tb = min(tb, B)
    if tb < B:
        tb = max(8, (tb // 8) * 8)   # sublane alignment for the (tb, F) output
        tb = min(tb, B)

    grid = (pl.cdiv(B, tb),)         # partial last block handled by Pallas

    # ---- honest VMEM accounting ------------------------------------------
    x_block = tb * S * F * itemsize
    out_block = tb * F * itemsize
    a_block = tb * S * itemsize
    mask_block = tb * S * itemsize if mask is not None else 0
    small = (F + S) * itemsize
    f32_temps = 2 * tb * S * F * 4   # fused multiply temp + reshape copy slack
    needed = 2 * (x_block + out_block + a_block + mask_block + small) + f32_temps
    vmem_limit = int(min(max(needed + (4 << 20), 32 << 20), 64 << 20))

    in_specs = [
        pl.BlockSpec((tb, S, F), lambda i: (i, 0, 0)),   # x rows
        pl.BlockSpec((F, 1), lambda i: (0, 0)),          # weight
        pl.BlockSpec((1, S, 1), lambda i: (0, 0, 0)),    # bias
    ]
    args = [x, w_arr, b_arr]
    if mask is not None:
        in_specs.append(pl.BlockSpec((tb, S, 1), lambda i: (i, 0, 0)))
        args.append(jnp.asarray(mask, x.dtype).reshape(B, S, 1))

    kernel = functools.partial(_attention_kernel, use_mask=mask is not None)

    out, a3 = pl.pallas_call(
        kernel,
        out_shape=(jax.ShapeDtypeStruct((B, F), x.dtype),
                   jax.ShapeDtypeStruct((B, S, 1), x.dtype)),
        grid_spec=pltpu.PrefetchScalarGridSpec(
            num_scalar_prefetch=0,
            grid=grid,
            in_specs=in_specs,
            out_specs=[pl.BlockSpec((tb, F), lambda i: (i, 0)),
                       pl.BlockSpec((tb, S, 1), lambda i: (i, 0, 0))],
        ),
        compiler_params=pltpu.CompilerParams(
            dimension_semantics=("parallel",),
            vmem_limit_bytes=vmem_limit),
    )(*args)

    return out, a3.reshape(B, S)     # trailing-1 reshape is free on the host


def _reference(x, weight, bias=None, mask=None):
    """Pure-JAX exact-f32 reference matching the PyTorch Attention.forward."""
    xf = x.astype(jnp.float32)
    w = jnp.asarray(weight, jnp.float32).reshape(-1)
    eij = jnp.sum(xf * w[None, None, :], axis=-1)          # exact f32 (no MXU)
    if bias is not None:
        eij = eij + jnp.asarray(bias, jnp.float32)
    c = jnp.exp(jnp.tanh(eij))
    if mask is not None:
        c = c * jnp.asarray(mask, jnp.float32)
    a = c / jnp.sum(c, axis=1, keepdims=True) + 1e-10
    out = jnp.sum(xf * a[..., None], axis=1)
    return out.astype(x.dtype), a.astype(x.dtype)


if __name__ == "__main__":
    key = jax.random.PRNGKey(0)
    k1, k2, k3, k4, k5 = jax.random.split(key, 5)

    TOL = dict(atol=2e-3, rtol=2e-3)

    # --- Test 1: lane-dense feature dim, no mask, default batch tile --------
    B, S, F = 4, 16, 128
    x = jax.random.normal(k1, (B, S, F), dtype=jnp.float32)
    w = jax.random.normal(k2, (F, 1), dtype=jnp.float32) * 0.1   # xavier-ish
    b = jax.random.normal(k3, (S,), dtype=jnp.float32) * 0.1

    out, a = attention_forward(x, w, b)
    out, a = jax.block_until_ready((out, a))
    ref_out, ref_a = _reference(x, w, b)
    assert out.shape == (B, F) and a.shape == (B, S)
    assert jnp.allclose(out, ref_out, **TOL), "out mismatch (no mask)"
    assert jnp.allclose(a, ref_a, **TOL), "a mismatch (no mask)"

    # --- Test 2: small/unaligned feature dim, with mask, multi-block grid ---
    B2, S2, F2 = 16, 8, 32
    x2 = jax.random.normal(k4, (B2, S2, F2), dtype=jnp.float32)
    w2 = jax.random.normal(k5, (F2, 1), dtype=jnp.float32) * 0.2
    b2 = jnp.zeros((S2,), dtype=jnp.float32)
    mask = (jax.random.uniform(k1, (B2, S2)) > 0.3).astype(jnp.float32)
    mask = mask.at[:, 0].set(1.0)   # make sure every row has >= 1 active step

    out2, a2 = attention_forward(x2, w2, b2, mask=mask, tb=8)
    out2, a2 = jax.block_until_ready((out2, a2))
    ref_out2, ref_a2 = _reference(x2, w2, b2, mask=mask)
    assert out2.shape == (B2, F2) and a2.shape == (B2, S2)
    assert jnp.allclose(out2, ref_out2, **TOL), "out mismatch (mask)"
    assert jnp.allclose(a2, ref_a2, **TOL), "a mismatch (mask)"

    print("KERNEL_OK")
</pallas_src>

<mosaic_0001>
module attributes {stable_mosaic.version = 11 : i64} {
  func.func @_attention_kernel(%arg0: i32, %arg1: memref<4x16x128xf32, #tpu.memory_space<vmem>>, %arg2: memref<128x1xf32, #tpu.memory_space<vmem>>, %arg3: memref<1x16x1xf32, #tpu.memory_space<vmem>>, %arg4: memref<4x128xf32, #tpu.memory_space<vmem>>, %arg5: memref<4x16x1xf32, #tpu.memory_space<vmem>>) attributes {dimension_semantics = [#tpu.dimension_semantics<parallel>], iteration_bounds = array<i64: 1>, scalar_prefetch = 0 : i64, scratch_operands = 0 : i64, tpu.core_type = #tpu.core_type<tc>, window_params = [{transform_indices = @transform_0, window_bounds = array<i64: 4, 16, 128>}, {pipeline_mode = #tpu.pipeline_mode<synchronous>, transform_indices = @transform_1, window_bounds = array<i64: 128, 1>}, {pipeline_mode = #tpu.pipeline_mode<synchronous>, transform_indices = @transform_2, window_bounds = array<i64: 1, 16, 1>}, {transform_indices = @transform_3, window_bounds = array<i64: 4, 128>}, {transform_indices = @transform_4, window_bounds = array<i64: 4, 16, 1>}]} {
    %c0 = arith.constant 0 : index
    %c0_0 = arith.constant 0 : index
    %c0_1 = arith.constant 0 : index
    %0 = vector.load %arg1[%c0, %c0_0, %c0_1] : memref<4x16x128xf32, #tpu.memory_space<vmem>>, vector<4x16x128xf32>
    %c0_2 = arith.constant 0 : index
    %c0_3 = arith.constant 0 : index
    %1 = vector.load %arg2[%c0_2, %c0_3] : memref<128x1xf32, #tpu.memory_space<vmem>>, vector<128x1xf32>
    %2 = vector.shape_cast %0 : vector<4x16x128xf32> to vector<64x128xf32>
    %cst = arith.constant dense<0.000000e+00> : vector<64x1xf32>
    %3 = tpu.matmul %2, %1, %cst {dimension_numbers = #tpu.dot_dimension_numbers<[1], [0], [0], [1], [0, 0, 1, 1], [], []>, precision = #tpu.contract_precision<fp32>} : vector<64x128xf32>, vector<128x1xf32>, vector<64x1xf32> -> vector<64x1xf32>
    %4 = vector.shape_cast %3 : vector<64x1xf32> to vector<4x16x1xf32>
    %c0_4 = arith.constant 0 : index
    %c0_5 = arith.constant 0 : index
    %c0_6 = arith.constant 0 : index
    %5 = vector.load %arg3[%c0_4, %c0_5, %c0_6] : memref<1x16x1xf32, #tpu.memory_space<vmem>>, vector<1x16x1xf32>
    %6 = vector.broadcast %5 : vector<1x16x1xf32> to vector<4x16x1xf32>
    %7 = arith.addf %4, %6 : vector<4x16x1xf32>
    %8 = math.tanh %7 : vector<4x16x1xf32>
    %9 = math.exp %8 : vector<4x16x1xf32>
    %cst_7 = arith.constant dense<0.000000e+00> : vector<4x1xf32>
    %10 = vector.multi_reduction <add>, %9, %cst_7 [1] : vector<4x16x1xf32> to vector<4x1xf32>
    %11 = vector.shape_cast %10 : vector<4x1xf32> to vector<4x1x1xf32>
    %12 = vector.broadcast %11 : vector<4x1x1xf32> to vector<4x16x1xf32>
    %13 = arith.divf %9, %12 : vector<4x16x1xf32>
    %cst_8 = arith.constant 1.000000e-10 : f32
    %14 = vector.broadcast %cst_8 : f32 to vector<4x16x1xf32>
    %15 = arith.addf %13, %14 : vector<4x16x1xf32>
    %16 = vector.broadcast %15 : vector<4x16x1xf32> to vector<4x16x128xf32>
    %17 = arith.mulf %0, %16 : vector<4x16x128xf32>
    %cst_9 = arith.constant dense<0.000000e+00> : vector<4x128xf32>
    %18 = vector.multi_reduction <add>, %17, %cst_9 [1] : vector<4x16x128xf32> to vector<4x128xf32>
    %c0_10 = arith.constant 0 : index
    %c0_11 = arith.constant 0 : index
    %19 = vector.load %arg4[%c0_10, %c0_11] : memref<4x128xf32, #tpu.memory_space<vmem>>, vector<4x128xf32>
    tpu.vector_store %arg4[%c0_10, %c0_11], %18 {strides = array<i32>} : memref<4x128xf32, #tpu.memory_space<vmem>>, vector<4x128xf32>,
    %c0_12 = arith.constant 0 : index
    %c0_13 = arith.constant 0 : index
    %c0_14 = arith.constant 0 : index
    %20 = vector.load %arg5[%c0_12, %c0_13, %c0_14] : memref<4x16x1xf32, #tpu.memory_space<vmem>>, vector<4x16x1xf32>
    tpu.vector_store %arg5[%c0_12, %c0_13, %c0_14], %15 {strides = array<i32>} : memref<4x16x1xf32, #tpu.memory_space<vmem>>, vector<4x16x1xf32>,
    return
  }
  func.func @transform_0(%arg0: i32) -> (i32, i32, i32) {
    %c0_i32 = arith.constant 0 : i32
    %c0_i32_0 = arith.constant 0 : i32
    %c0_i32_1 = arith.constant 0 : i32
    return %arg0, %c0_i32, %c0_i32_0 : i32, i32, i32
  }
  func.func @transform_1(%arg0: i32) -> (i32, i32) {
    %c0_i32 = arith.constant 0 : i32
    %c0_i32_0 = arith.constant 0 : i32
    %c0_i32_1 = arith.constant 0 : i32
    return %c0_i32, %c0_i32_0 : i32, i32
  }
  func.func @transform_2(%arg0: i32) -> (i32, i32, i32) {
    %c0_i32 = arith.constant 0 : i32
    %c0_i32_0 = arith.constant 0 : i32
    %c0_i32_1 = arith.constant 0 : i32
    %c0_i32_2 = arith.constant 0 : i32
    return %c0_i32, %c0_i32_0, %c0_i32_1 : i32, i32, i32
  }
  func.func @transform_3(%arg0: i32) -> (i32, i32) {
    %c0_i32 = arith.constant 0 : i32
    %c0_i32_0 = arith.constant 0 : i32
    return %arg0, %c0_i32 : i32, i32
  }
  func.func @transform_4(%arg0: i32) -> (i32, i32, i32) {
    %c0_i32 = arith.constant 0 : i32
    %c0_i32_0 = arith.constant 0 : i32
    %c0_i32_1 = arith.constant 0 : i32
    return %arg0, %c0_i32, %c0_i32_0 : i32, i32, i32
  }
}

</mosaic_0001>

<llo_original>
// kernel: tpu_custom_call.1
$region0: #{tpu_custom_call.1}
  #allocation0 [shape = 'u32[]', space=smem, size = 0x4, offset = 0x4, fixed_abs, tag = 'smem constant byte address 0x4 - core index']
  #allocation1 [shape = 'u32[144,128]{1,0:T(1,128)}', space=vmem, size = 0x12000, scoped, tag = 'internal scratch']
  %s0 = inlined_call_operand.vmem [shape: f32[4,16,128], index: 0, kind: input, shape index: {}]
  %s1 = inlined_call_operand.vmem [shape: f32[128,1], index: 1, kind: input, shape index: {}]
  %s2 = inlined_call_operand.vmem [shape: f32[1,16,1], index: 2, kind: input, shape index: {}]
  %s3 = inlined_call_operand.hbm [shape: f32[4,128], index: 3, kind: output, shape index: {0}]
  %s4 = inlined_call_operand.vmem [shape: f32[4,16,1], index: 4, kind: output, shape index: {1}]
  %5 = xla_tuple %s3, %s4
  %s6 = sld [smem:[#allocation0]]
  $region30: #{tpu_custom_call.1} parent=0
    _
  %s8 = ssub.s32 1, %s6
  %s9 = scalar_select 0, %s8, %s6
  $region1: #{tpu_custom_call.1} parent=0
    #allocation2 [shape = 'u8[2048]{0}', space=vmem, size = 0x800, scoped, tag = 'output window, operand 0, single buffered']
    #allocation3 [shape = 's32[1]{0}', space=sflag, size = 0x4, scoped, tag = 'scoped memory for tpu_custom_call.1']
    %10 = vsyncpa [#allocation3], 0
    // Predicated region
    $region2: #{tpu_custom_call.1} parent=1 // pred_check
      _
    $region3: #{tpu_custom_call.1} parent=1 // pred_check_branch
      %12 = sbr.rel (0) target = $region5
    $region4: #{tpu_custom_call.1} parent=1 // pred_region
      _
    $region5: #{tpu_custom_call.1} parent=1 // pred_fallthru
      _
    // Predicated region
    $region6: #{tpu_custom_call.1} parent=1 // pred_check
      _
    $region7: #{tpu_custom_call.1} parent=1 // pred_check_branch
      %14 = sbr.rel (0) target = $region9
    $region8: #{tpu_custom_call.1} parent=1 // pred_region
      _
    $region9: #{tpu_custom_call.1} parent=1 // pred_fallthru
      _
    // Predicated region
    $region10: #{tpu_custom_call.1} parent=1 // pred_check
      _
    $region11: #{tpu_custom_call.1} parent=1 // pred_check_branch
      %16 = sbr.rel (0) target = $region13
    $region12: #{tpu_custom_call.1} parent=1 // pred_region
      _
    $region13: #{tpu_custom_call.1} parent=1 // pred_fallthru
      _
    %v17 = vld [vmem:[%s0] sm:$0xff]
    %v18 = vld [vmem:[%s0 + $0x8] sm:$0xff]
    %v19 = vld [vmem:[%s0 + $0x10] sm:$0xff]
    %v20 = vld [vmem:[%s0 + $0x18] sm:$0xff]
    %v21 = vld [vmem:[%s0 + $0x20] sm:$0xff]
    %v22 = vld [vmem:[%s0 + $0x28] sm:$0xff]
    %v23 = vld [vmem:[%s0 + $0x30] sm:$0xff]
    %v24 = vld [vmem:[%s0 + $0x38] sm:$0xff]
    %v25 = vld [vmem:[%s1] sm:$0xff]
    %v26 = vld [vmem:[%s1 + $0x8] sm:$0xff]
    %v27 = vld [vmem:[%s1 + $0x10] sm:$0xff]
    %v28 = vld [vmem:[%s1 + $0x18] sm:$0xff]
    %v29 = vld [vmem:[%s1 + $0x20] sm:$0xff]
    %v30 = vld [vmem:[%s1 + $0x28] sm:$0xff]
    %v31 = vld [vmem:[%s1 + $0x30] sm:$0xff]
    %v32 = vld [vmem:[%s1 + $0x38] sm:$0xff]
    %v33 = vld [vmem:[%s1 + $0x40] sm:$0xff]
    %v34 = vld [vmem:[%s1 + $0x48] sm:$0xff]
    %v35 = vld [vmem:[%s1 + $0x50] sm:$0xff]
    %v36 = vld [vmem:[%s1 + $0x58] sm:$0xff]
    %v37 = vld [vmem:[%s1 + $0x60] sm:$0xff]
    %v38 = vld [vmem:[%s1 + $0x68] sm:$0xff]
    %v39 = vld [vmem:[%s1 + $0x70] sm:$0xff]
    %v40 = vld [vmem:[%s1 + $0x78] sm:$0xff]
    %41 = vmatprep.subr.mxu0 0.0
    %v42 = vand.u32 %v40, 4294901760
    %43 = vmatpush1.msra.mxu0 %v42
    %44 = vmatprep.subr.mxu0 0.0
    %v45 = vand.u32 %v39, 4294901760
    %46 = vmatpush1.msra.mxu0 %v45
    %47 = vmatprep.subr.mxu0 0.0
    %v48 = vand.u32 %v38, 4294901760
    %49 = vmatpush1.msra.mxu0 %v48
    %50 = vmatprep.subr.mxu0 0.0
    %v51 = vand.u32 %v37, 4294901760
    %52 = vmatpush1.msra.mxu0 %v51
    %53 = vmatprep.subr.mxu0 0.0
    %v54 = vand.u32 %v36, 4294901760
    %55 = vmatpush1.msra.mxu0 %v54
    %56 = vmatprep.subr.mxu0 0.0
    %v57 = vand.u32 %v35, 4294901760
    %58 = vmatpush1.msra.mxu0 %v57
    %59 = vmatprep.subr.mxu0 0.0
    %v60 = vand.u32 %v34, 4294901760
    %61 = vmatpush1.msra.mxu0 %v60
    %62 = vmatprep.subr.mxu0 0.0
    %v63 = vand.u32 %v33, 4294901760
    %64 = vmatpush1.msra.mxu0 %v63
    %65 = vmatprep.subr.mxu0 0.0
    %v66 = vand.u32 %v32, 4294901760
    %67 = vmatpush1.msra.mxu0 %v66
    %68 = vmatprep.subr.mxu0 0.0
    %v69 = vand.u32 %v31, 4294901760
    %70 = vmatpush1.msra.mxu0 %v69
    %71 = vmatprep.subr.mxu0 0.0
    %v72 = vand.u32 %v30, 4294901760
    %73 = vmatpush1.msra.mxu0 %v72
    %74 = vmatprep.subr.mxu0 0.0
    %v75 = vand.u32 %v29, 4294901760
    %76 = vmatpush1.msra.mxu0 %v75
    %77 = vmatprep.subr.mxu0 0.0
    %v78 = vand.u32 %v28, 4294901760
    %79 = vmatpush1.msra.mxu0 %v78
    %80 = vmatprep.subr.mxu0 0.0
    %v81 = vand.u32 %v27, 4294901760
    %82 = vmatpush1.msra.mxu0 %v81
    %83 = vmatprep.subr.mxu0 0.0
    %v84 = vand.u32 %v26, 4294901760
    %85 = vmatpush1.msra.mxu0 %v84
    %86 = vmatprep.subr.mxu0 0.0
    %v87 = vand.u32 %v25, 4294901760
    %88 = vmatpush1.msra.mxu0 %v87
    %89 = vmatprep.subr.mxu0 0.0
    %90 = vmatpush2.msra.mxu0 0.0
    %91 = vmatprep.subr.mxu0 0.0
    %92 = vmatpush2.msra.mxu0 0.0
    %93 = vmatprep.subr.mxu0 0.0
    %94 = vmatpush2.msra.mxu0 0.0
    %95 = vmatprep.subr.mxu0 0.0
    %96 = vmatpush2.msra.mxu0 0.0
    %97 = vmatprep.subr.mxu0 0.0
    %98 = vmatpush2.msra.mxu0 0.0
    %99 = vmatprep.subr.mxu0 0.0
    %100 = vmatpush2.msra.mxu0 0.0
    %101 = vmatprep.subr.mxu0 0.0
    %102 = vmatpush2.msra.mxu0 0.0
    %103 = vmatprep.subr.mxu0 0.0
    %104 = vmatpush2.msra.mxu0 0.0
    %105 = vmatprep.subr.mxu0 0.0
    %106 = vmatpush2.msra.mxu0 0.0
    %107 = vmatprep.subr.mxu0 0.0
    %108 = vmatpush2.msra.mxu0 0.0
    %109 = vmatprep.subr.mxu0 0.0
    %110 = vmatpush2.msra.mxu0 0.0
    %111 = vmatprep.subr.mxu0 0.0
    %112 = vmatpush2.msra.mxu0 0.0
    %113 = vmatprep.subr.mxu0 0.0
    %114 = vmatpush2.msra.mxu0 0.0
    %115 = vmatprep.subr.mxu0 0.0
    %116 = vmatpush2.msra.mxu0 0.0
    %117 = vmatprep.subr.mxu0 0.0
    %118 = vmatpush2.msra.mxu0 0.0
    %119 = vmatprep.subr.mxu0 0.0
    %120 = vmatpush2.msra.mxu0 0.0
    %121 = vmatprep.mubr.f32.mxu0 0.0
    %v122 = vand.u32 %v17, 4294901760
    %v123 = vsub.f32 %v17, %v122
    %v124 = vand.u32 %v123, 4294901760
    %v125 = vsub.f32 %v123, %v124
    %v126 = vand.u32 %v125, 4294901760
    %127 = vmatmul.mubr.f32.gmra.mxu0 %v126
    %v128 = vpop.f32.mrf.mxu0
    %v129 = vadd.f32 0.0, %v128
    %v130 = vpop.f32.mrf.mxu0
    %131 = vmatprep.mubr.f32.mxu0 0.0
    %v132 = vand.u32 %v18, 4294901760
    %v133 = vsub.f32 %v18, %v132
    %v134 = vand.u32 %v133, 4294901760
    %v135 = vsub.f32 %v133, %v134
    %v136 = vand.u32 %v135, 4294901760
    %137 = vmatmul.mubr.f32.gmra.mxu0 %v136
    %v138 = vpop.f32.mrf.mxu0
    %v139 = vadd.f32 0.0, %v138
    %v140 = vpop.f32.mrf.mxu0
    %141 = vmatprep.mubr.f32.mxu0 0.0
    %v142 = vand.u32 %v19, 4294901760
    %v143 = vsub.f32 %v19, %v142
    %v144 = vand.u32 %v143, 4294901760
    %v145 = vsub.f32 %v143, %v144
    %v146 = vand.u32 %v145, 4294901760
    %147 = vmatmul.mubr.f32.gmra.mxu0 %v146
    %v148 = vpop.f32.mrf.mxu0
    %v149 = vadd.f32 0.0, %v148
    %v150 = vpop.f32.mrf.mxu0
    %151 = vmatprep.mubr.f32.mxu0 0.0
    %v152 = vand.u32 %v20, 4294901760
    %v153 = vsub.f32 %v20, %v152
    %v154 = vand.u32 %v153, 4294901760
    %v155 = vsub.f32 %v153, %v154
    %v156 = vand.u32 %v155, 4294901760
    %157 = vmatmul.mubr.f32.gmra.mxu0 %v156
    %v158 = vpop.f32.mrf.mxu0
    %v159 = vadd.f32 0.0, %v158
    %v160 = vpop.f32.mrf.mxu0
    %161 = vmatprep.mubr.f32.mxu0 0.0
    %v162 = vand.u32 %v21, 4294901760
    %v163 = vsub.f32 %v21, %v162
    %v164 = vand.u32 %v163, 4294901760
    %v165 = vsub.f32 %v163, %v164
    %v166 = vand.u32 %v165, 4294901760
    %167 = vmatmul.mubr.f32.gmra.mxu0 %v166
    %v168 = vpop.f32.mrf.mxu0
    %v169 = vadd.f32 0.0, %v168
    %v170 = vpop.f32.mrf.mxu0
    %171 = vmatprep.mubr.f32.mxu0 0.0
    %v172 = vand.u32 %v22, 4294901760
    %v173 = vsub.f32 %v22, %v172
    %v174 = vand.u32 %v173, 4294901760
    %v175 = vsub.f32 %v173, %v174
    %v176 = vand.u32 %v175, 4294901760
    %177 = vmatmul.mubr.f32.gmra.mxu0 %v176
    %v178 = vpop.f32.mrf.mxu0
    %v179 = vadd.f32 0.0, %v178
    %v180 = vpop.f32.mrf.mxu0
    %181 = vmatprep.mubr.f32.mxu0 0.0
    %v182 = vand.u32 %v23, 4294901760
    %v183 = vsub.f32 %v23, %v182
    %v184 = vand.u32 %v183, 4294901760
    %v185 = vsub.f32 %v183, %v184
    %v186 = vand.u32 %v185, 4294901760
    %187 = vmatmul.mubr.f32.gmra.mxu0 %v186
    %v188 = vpop.f32.mrf.mxu0
    %v189 = vadd.f32 0.0, %v188
    %v190 = vpop.f32.mrf.mxu0
    %191 = vmatprep.mubr.f32.mxu0 0.0
    %v192 = vand.u32 %v24, 4294901760
    %v193 = vsub.f32 %v24, %v192
    %v194 = vand.u32 %v193, 4294901760
    %v195 = vsub.f32 %v193, %v194
    %v196 = vand.u32 %v195, 4294901760
    %197 = vmatmul.mubr.f32.gmra.mxu0 %v196
    %v198 = vpop.f32.mrf.mxu0
    %v199 = vadd.f32 0.0, %v198
    %v200 = vpop.f32.mrf.mxu0
    %201 = vdwg.mxu0
    %202 = vmatprep.subr.mxu0 0.0
    %v203 = vand.u32 %v40, 4294901760
    %v204 = vsub.f32 %v40, %v203
    %v205 = vand.u32 %v204, 4294901760
    %v206 = vsub.f32 %v204, %v205
    %v207 = vand.u32 %v206, 4294901760
    %208 = vmatpush1.msra.mxu0 %v207
    %209 = vmatprep.subr.mxu0 0.0
    %v210 = vand.u32 %v39, 4294901760
    %v211 = vsub.f32 %v39, %v210
    %v212 = vand.u32 %v211, 4294901760
    %v213 = vsub.f32 %v211, %v212
    %v214 = vand.u32 %v213, 4294901760
    %215 = vmatpush1.msra.mxu0 %v214
    %216 = vmatprep.subr.mxu0 0.0
    %v217 = vand.u32 %v38, 4294901760
    %v218 = vsub.f32 %v38, %v217
    %v219 = vand.u32 %v218, 4294901760
    %v220 = vsub.f32 %v218, %v219
    %v221 = vand.u32 %v220, 4294901760
    %222 = vmatpush1.msra.mxu0 %v221
    %223 = vmatprep.subr.mxu0 0.0
    %v224 = vand.u32 %v37, 4294901760
    %v225 = vsub.f32 %v37, %v224
    %v226 = vand.u32 %v225, 4294901760
    %v227 = vsub.f32 %v225, %v226
    %v228 = vand.u32 %v227, 4294901760
    %229 = vmatpush1.msra.mxu0 %v228
    %230 = vmatprep.subr.mxu0 0.0
    %v231 = vand.u32 %v36, 4294901760
    %v232 = vsub.f32 %v36, %v231
    %v233 = vand.u32 %v232, 4294901760
    %v234 = vsub.f32 %v232, %v233
    %v235 = vand.u32 %v234, 4294901760
    %236 = vmatpush1.msra.mxu0 %v235
    %237 = vmatprep.subr.mxu0 0.0
    %v238 = vand.u32 %v35, 4294901760
    %v239 = vsub.f32 %v35, %v238
    %v240 = vand.u32 %v239, 4294901760
    %v241 = vsub.f32 %v239, %v240
    %v242 = vand.u32 %v241, 4294901760
    %243 = vmatpush1.msra.mxu0 %v242
    %244 = vmatprep.subr.mxu0 0.0
    %v245 = vand.u32 %v34, 4294901760
    %v246 = vsub.f32 %v34, %v245
    %v247 = vand.u32 %v246, 4294901760
    %v248 = vsub.f32 %v246, %v247
    %v249 = vand.u32 %v248, 4294901760
    %250 = vmatpush1.msra.mxu0 %v249
    %251 = vmatprep.subr.mxu0 0.0
    %v252 = vand.u32 %v33, 4294901760
    %v253 = vsub.f32 %v33, %v252
    %v254 = vand.u32 %v253, 4294901760
    %v255 = vsub.f32 %v253, %v254
    %v256 = vand.u32 %v255, 4294901760
    %257 = vmatpush1.msra.mxu0 %v256
    %258 = vmatprep.subr.mxu0 0.0
    %v259 = vand.u32 %v32, 4294901760
    %v260 = vsub.f32 %v32, %v259
    %v261 = vand.u32 %v260, 4294901760
    %v262 = vsub.f32 %v260, %v261
    %v263 = vand.u32 %v262, 4294901760
    %264 = vmatpush1.msra.mxu0 %v263
    %265 = vmatprep.subr.mxu0 0.0
    %v266 = vand.u32 %v31, 4294901760
    %v267 = vsub.f32 %v31, %v266
    %v268 = vand.u32 %v267, 4294901760
    %v269 = vsub.f32 %v267, %v268
    %v270 = vand.u32 %v269, 4294901760
    %271 = vmatpush1.msra.mxu0 %v270
    %272 = vmatprep.subr.mxu0 0.0
    %v273 = vand.u32 %v30, 4294901760
    %v274 = vsub.f32 %v30, %v273
    %v275 = vand.u32 %v274, 4294901760
    %v276 = vsub.f32 %v274, %v275
    %v277 = vand.u32 %v276, 4294901760
    %278 = vmatpush1.msra.mxu0 %v277
    %279 = vmatprep.subr.mxu0 0.0
    %v280 = vand.u32 %v29, 4294901760
    %v281 = vsub.f32 %v29, %v280
    %v282 = vand.u32 %v281, 4294901760
    %v283 = vsub.f32 %v281, %v282
    %v284 = vand.u32 %v283, 4294901760
    %285 = vmatpush1.msra.mxu0 %v284
    %286 = vmatprep.subr.mxu0 0.0
    %v287 = vand.u32 %v28, 4294901760
    %v288 = vsub.f32 %v28, %v287
    %v289 = vand.u32 %v288, 4294901760
    %v290 = vsub.f32 %v288, %v289
    %v291 = vand.u32 %v290, 4294901760
    %292 = vmatpush1.msra.mxu0 %v291
    %293 = vmatprep.subr.mxu0 0.0
    %v294 = vand.u32 %v27, 4294901760
    %v295 = vsub.f32 %v27, %v294
    %v296 = vand.u32 %v295, 4294901760
    %v297 = vsub.f32 %v295, %v296
    %v298 = vand.u32 %v297, 4294901760
    %299 = vmatpush1.msra.mxu0 %v298
    %300 = vmatprep.subr.mxu0 0.0
    %v301 = vand.u32 %v26, 4294901760
    %v302 = vsub.f32 %v26, %v301
    %v303 = vand.u32 %v302, 4294901760
    %v304 = vsub.f32 %v302, %v303
    %v305 = vand.u32 %v304, 4294901760
    %306 = vmatpush1.msra.mxu0 %v305
    %307 = vmatprep.subr.mxu0 0.0
    %v308 = vand.u32 %v25, 4294901760
    %v309 = vsub.f32 %v25, %v308
    %v310 = vand.u32 %v309, 4294901760
    %v311 = vsub.f32 %v309, %v310
    %v312 = vand.u32 %v311, 4294901760
    %313 = vmatpush1.msra.mxu0 %v312
    %314 = vmatprep.subr.mxu0 0.0
    %315 = vmatpush2.msra.mxu0 0.0
    %316 = vmatprep.subr.mxu0 0.0
    %317 = vmatpush2.msra.mxu0 0.0
    %318 = vmatprep.subr.mxu0 0.0
    %319 = vmatpush2.msra.mxu0 0.0
    %320 = vmatprep.subr.mxu0 0.0
    %321 = vmatpush2.msra.mxu0 0.0
    %322 = vmatprep.subr.mxu0 0.0
    %323 = vmatpush2.msra.mxu0 0.0
    %324 = vmatprep.subr.mxu0 0.0
    %325 = vmatpush2.msra.mxu0 0.0
    %326 = vmatprep.subr.mxu0 0.0
    %327 = vmatpush2.msra.mxu0 0.0
    %328 = vmatprep.subr.mxu0 0.0
    %329 = vmatpush2.msra.mxu0 0.0
    %330 = vmatprep.subr.mxu0 0.0
    %331 = vmatpush2.msra.mxu0 0.0
    %332 = vmatprep.subr.mxu0 0.0
    %333 = vmatpush2.msra.mxu0 0.0
    %334 = vmatprep.subr.mxu0 0.0
    %335 = vmatpush2.msra.mxu0 0.0
    %336 = vmatprep.subr.mxu0 0.0
    %337 = vmatpush2.msra.mxu0 0.0
    %338 = vmatprep.subr.mxu0 0.0
    %339 = vmatpush2.msra.mxu0 0.0
    %340 = vmatprep.subr.mxu0 0.0
    %341 = vmatpush2.msra.mxu0 0.0
    %342 = vmatprep.subr.mxu0 0.0
    %343 = vmatpush2.msra.mxu0 0.0
    %344 = vmatprep.subr.mxu0 0.0
    %345 = vmatpush2.msra.mxu0 0.0
    %346 = vmatprep.mubr.f32.mxu0 0.0
    %v347 = vand.u32 %v17, 4294901760
    %348 = vmatmul.mubr.f32.gmra.mxu0 %v347
    %v349 = vpop.f32.mrf.mxu0
    %v350 = vadd.f32 %v129, %v349
    %v351 = vpop.f32.mrf.mxu0
    %352 = vmatprep.mubr.f32.mxu0 0.0
    %v353 = vand.u32 %v18, 4294901760
    %354 = vmatmul.mubr.f32.gmra.mxu0 %v353
    %v355 = vpop.f32.mrf.mxu0
    %v356 = vadd.f32 %v139, %v355
    %v357 = vpop.f32.mrf.mxu0
    %358 = vmatprep.mubr.f32.mxu0 0.0
    %v359 = vand.u32 %v19, 4294901760
    %360 = vmatmul.mubr.f32.gmra.mxu0 %v359
    %v361 = vpop.f32.mrf.mxu0
    %v362 = vadd.f32 %v149, %v361
    %v363 = vpop.f32.mrf.mxu0
    %364 = vmatprep.mubr.f32.mxu0 0.0
    %v365 = vand.u32 %v20, 4294901760
    %366 = vmatmul.mubr.f32.gmra.mxu0 %v365
    %v367 = vpop.f32.mrf.mxu0
    %v368 = vadd.f32 %v159, %v367
    %v369 = vpop.f32.mrf.mxu0
    %370 = vmatprep.mubr.f32.mxu0 0.0
    %v371 = vand.u32 %v21, 4294901760
    %372 = vmatmul.mubr.f32.gmra.mxu0 %v371
    %v373 = vpop.f32.mrf.mxu0
    %v374 = vadd.f32 %v169, %v373
    %v375 = vpop.f32.mrf.mxu0
    %376 = vmatprep.mubr.f32.mxu0 0.0
    %v377 = vand.u32 %v22, 4294901760
    %378 = vmatmul.mubr.f32.gmra.mxu0 %v377
    %v379 = vpop.f32.mrf.mxu0
    %v380 = vadd.f32 %v179, %v379
    %v381 = vpop.f32.mrf.mxu0
    %382 = vmatprep.mubr.f32.mxu0 0.0
    %v383 = vand.u32 %v23, 4294901760
    %384 = vmatmul.mubr.f32.gmra.mxu0 %v383
    %v385 = vpop.f32.mrf.mxu0
    %v386 = vadd.f32 %v189, %v385
    %v387 = vpop.f32.mrf.mxu0
    %388 = vmatprep.mubr.f32.mxu0 0.0
    %v389 = vand.u32 %v24, 4294901760
    %390 = vmatmul.mubr.f32.gmra.mxu0 %v389
    %v391 = vpop.f32.mrf.mxu0
    %v392 = vadd.f32 %v199, %v391
    %v393 = vpop.f32.mrf.mxu0
    %394 = vdwg.mxu0
    %395 = vmatprep.subr.mxu0 0.0
    %v396 = vand.u32 %v40, 4294901760
    %v397 = vsub.f32 %v40, %v396
    %398 = vmatpush1.msra.mxu0 %v397
    %399 = vmatprep.subr.mxu0 0.0
    %v400 = vand.u32 %v39, 4294901760
    %v401 = vsub.f32 %v39, %v400
    %402 = vmatpush1.msra.mxu0 %v401
    %403 = vmatprep.subr.mxu0 0.0
    %v404 = vand.u32 %v38, 4294901760
    %v405 = vsub.f32 %v38, %v404
    %406 = vmatpush1.msra.mxu0 %v405
    %407 = vmatprep.subr.mxu0 0.0
    %v408 = vand.u32 %v37, 4294901760
    %v409 = vsub.f32 %v37, %v408
    %410 = vmatpush1.msra.mxu0 %v409
    %411 = vmatprep.subr.mxu0 0.0
    %v412 = vand.u32 %v36, 4294901760
    %v413 = vsub.f32 %v36, %v412
    %414 = vmatpush1.msra.mxu0 %v413
    %415 = vmatprep.subr.mxu0 0.0
    %v416 = vand.u32 %v35, 4294901760
    %v417 = vsub.f32 %v35, %v416
    %418 = vmatpush1.msra.mxu0 %v417
    %419 = vmatprep.subr.mxu0 0.0
    %v420 = vand.u32 %v34, 4294901760
    %v421 = vsub.f32 %v34, %v420
    %422 = vmatpush1.msra.mxu0 %v421
    %423 = vmatprep.subr.mxu0 0.0
    %v424 = vand.u32 %v33, 4294901760
    %v425 = vsub.f32 %v33, %v424
    %426 = vmatpush1.msra.mxu0 %v425
    %427 = vmatprep.subr.mxu0 0.0
    %v428 = vand.u32 %v32, 4294901760
    %v429 = vsub.f32 %v32, %v428
    %430 = vmatpush1.msra.mxu0 %v429
    %431 = vmatprep.subr.mxu0 0.0
    %v432 = vand.u32 %v31, 4294901760
    %v433 = vsub.f32 %v31, %v432
    %434 = vmatpush1.msra.mxu0 %v433
    %435 = vmatprep.subr.mxu0 0.0
    %v436 = vand.u32 %v30, 4294901760
    %v437 = vsub.f32 %v30, %v436
    %438 = vmatpush1.msra.mxu0 %v437
    %439 = vmatprep.subr.mxu0 0.0
    %v440 = vand.u32 %v29, 4294901760
    %v441 = vsub.f32 %v29, %v440
    %442 = vmatpush1.msra.mxu0 %v441
    %443 = vmatprep.subr.mxu0 0.0
    %v444 = vand.u32 %v28, 4294901760
    %v445 = vsub.f32 %v28, %v444
    %446 = vmatpush1.msra.mxu0 %v445
    %447 = vmatprep.subr.mxu0 0.0
    %v448 = vand.u32 %v27, 4294901760
    %v449 = vsub.f32 %v27, %v448
    %450 = vmatpush1.msra.mxu0 %v449
    %451 = vmatprep.subr.mxu0 0.0
    %v452 = vand.u32 %v26, 4294901760
    %v453 = vsub.f32 %v26, %v452
    %454 = vmatpush1.msra.mxu0 %v453
    %455 = vmatprep.subr.mxu0 0.0
    %v456 = vand.u32 %v25, 4294901760
    %v457 = vsub.f32 %v25, %v456
    %458 = vmatpush1.msra.mxu0 %v457
    %459 = vmatprep.subr.mxu0 0.0
    %460 = vmatpush2.msra.mxu0 0.0
    %461 = vmatprep.subr.mxu0 0.0
    %462 = vmatpush2.msra.mxu0 0.0
    %463 = vmatprep.subr.mxu0 0.0
    %464 = vmatpush2.msra.mxu0 0.0
    %465 = vmatprep.subr.mxu0 0.0
    %466 = vmatpush2.msra.mxu0 0.0
    %467 = vmatprep.subr.mxu0 0.0
    %468 = vmatpush2.msra.mxu0 0.0
    %469 = vmatprep.subr.mxu0 0.0
    %470 = vmatpush2.msra.mxu0 0.0
    %471 = vmatprep.subr.mxu0 0.0
    %472 = vmatpush2.msra.mxu0 0.0
    %473 = vmatprep.subr.mxu0 0.0
    %474 = vmatpush2.msra.mxu0 0.0
    %475 = vmatprep.subr.mxu0 0.0
    %476 = vmatpush2.msra.mxu0 0.0
    %477 = vmatprep.subr.mxu0 0.0
    %478 = vmatpush2.msra.mxu0 0.0
    %479 = vmatprep.subr.mxu0 0.0
    %480 = vmatpush2.msra.mxu0 0.0
    %481 = vmatprep.subr.mxu0 0.0
    %482 = vmatpush2.msra.mxu0 0.0
    %483 = vmatprep.subr.mxu0 0.0
    %484 = vmatpush2.msra.mxu0 0.0
    %485 = vmatprep.subr.mxu0 0.0
    %486 = vmatpush2.msra.mxu0 0.0
    %487 = vmatprep.subr.mxu0 0.0
    %488 = vmatpush2.msra.mxu0 0.0
    %489 = vmatprep.subr.mxu0 0.0
    %490 = vmatpush2.msra.mxu0 0.0
    %491 = vmatprep.mubr.f32.mxu0 0.0
    %v492 = vand.u32 %v17, 4294901760
    %v493 = vsub.f32 %v17, %v492
    %494 = vmatmul.mubr.f32.gmra.mxu0 %v493
    %v495 = vpop.f32.mrf.mxu0
    %v496 = vadd.f32 %v350, %v495
    %v497 = vpop.f32.mrf.mxu0
    %498 = vmatprep.mubr.f32.mxu0 0.0
    %v499 = vand.u32 %v18, 4294901760
    %v500 = vsub.f32 %v18, %v499
    %501 = vmatmul.mubr.f32.gmra.mxu0 %v500
    %v502 = vpop.f32.mrf.mxu0
    %v503 = vadd.f32 %v356, %v502
    %v504 = vpop.f32.mrf.mxu0
    %505 = vmatprep.mubr.f32.mxu0 0.0
    %v506 = vand.u32 %v19, 4294901760
    %v507 = vsub.f32 %v19, %v506
    %508 = vmatmul.mubr.f32.gmra.mxu0 %v507
    %v509 = vpop.f32.mrf.mxu0
    %v510 = vadd.f32 %v362, %v509
    %v511 = vpop.f32.mrf.mxu0
    %512 = vmatprep.mubr.f32.mxu0 0.0
    %v513 = vand.u32 %v20, 4294901760
    %v514 = vsub.f32 %v20, %v513
    %515 = vmatmul.mubr.f32.gmra.mxu0 %v514
    %v516 = vpop.f32.mrf.mxu0
    %v517 = vadd.f32 %v368, %v516
    %v518 = vpop.f32.mrf.mxu0
    %519 = vmatprep.mubr.f32.mxu0 0.0
    %v520 = vand.u32 %v21, 4294901760
    %v521 = vsub.f32 %v21, %v520
    %522 = vmatmul.mubr.f32.gmra.mxu0 %v521
    %v523 = vpop.f32.mrf.mxu0
    %v524 = vadd.f32 %v374, %v523
    %v525 = vpop.f32.mrf.mxu0
    %526 = vmatprep.mubr.f32.mxu0 0.0
    %v527 = vand.u32 %v22, 4294901760
    %v528 = vsub.f32 %v22, %v527
    %529 = vmatmul.mubr.f32.gmra.mxu0 %v528
    %v530 = vpop.f32.mrf.mxu0
    %v531 = vadd.f32 %v380, %v530
    %v532 = vpop.f32.mrf.mxu0
    %533 = vmatprep.mubr.f32.mxu0 0.0
    %v534 = vand.u32 %v23, 4294901760
    %v535 = vsub.f32 %v23, %v534
    %536 = vmatmul.mubr.f32.gmra.mxu0 %v535
    %v537 = vpop.f32.mrf.mxu0
    %v538 = vadd.f32 %v386, %v537
    %v539 = vpop.f32.mrf.mxu0
    %540 = vmatprep.mubr.f32.mxu0 0.0
    %v541 = vand.u32 %v24, 4294901760
    %v542 = vsub.f32 %v24, %v541
    %543 = vmatmul.mubr.f32.gmra.mxu0 %v542
    %v544 = vpop.f32.mrf.mxu0
    %v545 = vadd.f32 %v392, %v544
    %v546 = vpop.f32.mrf.mxu0
    %547 = vdwg.mxu0
    %548 = vmatprep.subr.mxu0 0.0
    %v549 = vand.u32 %v40, 4294901760
    %550 = vmatpush1.msra.mxu0 %v549
    %551 = vmatprep.subr.mxu0 0.0
    %v552 = vand.u32 %v39, 4294901760
    %553 = vmatpush1.msra.mxu0 %v552
    %554 = vmatprep.subr.mxu0 0.0
    %v555 = vand.u32 %v38, 4294901760
    %556 = vmatpush1.msra.mxu0 %v555
    %557 = vmatprep.subr.mxu0 0.0
    %v558 = vand.u32 %v37, 4294901760
    %559 = vmatpush1.msra.mxu0 %v558
    %560 = vmatprep.subr.mxu0 0.0
    %v561 = vand.u32 %v36, 4294901760
    %562 = vmatpush1.msra.mxu0 %v561
    %563 = vmatprep.subr.mxu0 0.0
    %v564 = vand.u32 %v35, 4294901760
    %565 = vmatpush1.msra.mxu0 %v564
    %566 = vmatprep.subr.mxu0 0.0
    %v567 = vand.u32 %v34, 4294901760
    %568 = vmatpush1.msra.mxu0 %v567
    %569 = vmatprep.subr.mxu0 0.0
    %v570 = vand.u32 %v33, 4294901760
    %571 = vmatpush1.msra.mxu0 %v570
    %572 = vmatprep.subr.mxu0 0.0
    %v573 = vand.u32 %v32, 4294901760
    %574 = vmatpush1.msra.mxu0 %v573
    %575 = vmatprep.subr.mxu0 0.0
    %v576 = vand.u32 %v31, 4294901760
    %577 = vmatpush1.msra.mxu0 %v576
    %578 = vmatprep.subr.mxu0 0.0
    %v579 = vand.u32 %v30, 4294901760
    %580 = vmatpush1.msra.mxu0 %v579
    %581 = vmatprep.subr.mxu0 0.0
    %v582 = vand.u32 %v29, 4294901760
    %583 = vmatpush1.msra.mxu0 %v582
    %584 = vmatprep.subr.mxu0 0.0
    %v585 = vand.u32 %v28, 4294901760
    %586 = vmatpush1.msra.mxu0 %v585
    %587 = vmatprep.subr.mxu0 0.0
    %v588 = vand.u32 %v27, 4294901760
    %589 = vmatpush1.msra.mxu0 %v588
    %590 = vmatprep.subr.mxu0 0.0
    %v591 = vand.u32 %v26, 4294901760
    %592 = vmatpush1.msra.mxu0 %v591
    %593 = vmatprep.subr.mxu0 0.0
    %v594 = vand.u32 %v25, 4294901760
    %595 = vmatpush1.msra.mxu0 %v594
    %596 = vmatprep.subr.mxu0 0.0
    %597 = vmatpush2.msra.mxu0 0.0
    %598 = vmatprep.subr.mxu0 0.0
    %599 = vmatpush2.msra.mxu0 0.0
    %600 = vmatprep.subr.mxu0 0.0
    %601 = vmatpush2.msra.mxu0 0.0
    %602 = vmatprep.subr.mxu0 0.0
    %603 = vmatpush2.msra.mxu0 0.0
    %604 = vmatprep.subr.mxu0 0.0
    %605 = vmatpush2.msra.mxu0 0.0
    %606 = vmatprep.subr.mxu0 0.0
    %607 = vmatpush2.msra.mxu0 0.0
    %608 = vmatprep.subr.mxu0 0.0
    %609 = vmatpush2.msra.mxu0 0.0
    %610 = vmatprep.subr.mxu0 0.0
    %611 = vmatpush2.msra.mxu0 0.0
    %612 = vmatprep.subr.mxu0 0.0
    %613 = vmatpush2.msra.mxu0 0.0
    %614 = vmatprep.subr.mxu0 0.0
    %615 = vmatpush2.msra.mxu0 0.0
    %616 = vmatprep.subr.mxu0 0.0
    %617 = vmatpush2.msra.mxu0 0.0
    %618 = vmatprep.subr.mxu0 0.0
    %619 = vmatpush2.msra.mxu0 0.0
    %620 = vmatprep.subr.mxu0 0.0
    %621 = vmatpush2.msra.mxu0 0.0
    %622 = vmatprep.subr.mxu0 0.0
    %623 = vmatpush2.msra.mxu0 0.0
    %624 = vmatprep.subr.mxu0 0.0
    %625 = vmatpush2.msra.mxu0 0.0
    %626 = vmatprep.subr.mxu0 0.0
    %627 = vmatpush2.msra.mxu0 0.0
    %628 = vmatprep.mubr.f32.mxu0 0.0
    %v629 = vand.u32 %v17, 4294901760
    %v630 = vsub.f32 %v17, %v629
    %v631 = vand.u32 %v630, 4294901760
    %632 = vmatmul.mubr.f32.gmra.mxu0 %v631
    %v633 = vpop.f32.mrf.mxu0
    %v634 = vadd.f32 %v496, %v633
    %v635 = vpop.f32.mrf.mxu0
    %636 = vmatprep.mubr.f32.mxu0 0.0
    %v637 = vand.u32 %v18, 4294901760
    %v638 = vsub.f32 %v18, %v637
    %v639 = vand.u32 %v638, 4294901760
    %640 = vmatmul.mubr.f32.gmra.mxu0 %v639
    %v641 = vpop.f32.mrf.mxu0
    %v642 = vadd.f32 %v503, %v641
    %v643 = vpop.f32.mrf.mxu0
    %644 = vmatprep.mubr.f32.mxu0 0.0
    %v645 = vand.u32 %v19, 4294901760
    %v646 = vsub.f32 %v19, %v645
    %v647 = vand.u32 %v646, 4294901760
    %648 = vmatmul.mubr.f32.gmra.mxu0 %v647
    %v649 = vpop.f32.mrf.mxu0
    %v650 = vadd.f32 %v510, %v649
    %v651 = vpop.f32.mrf.mxu0
    %652 = vmatprep.mubr.f32.mxu0 0.0
    %v653 = vand.u32 %v20, 4294901760
    %v654 = vsub.f32 %v20, %v653
    %v655 = vand.u32 %v654, 4294901760
    %656 = vmatmul.mubr.f32.gmra.mxu0 %v655
    %v657 = vpop.f32.mrf.mxu0
    %v658 = vadd.f32 %v517, %v657
    %v659 = vpop.f32.mrf.mxu0
    %660 = vmatprep.mubr.f32.mxu0 0.0
    %v661 = vand.u32 %v21, 4294901760
    %v662 = vsub.f32 %v21, %v661
    %v663 = vand.u32 %v662, 4294901760
    %664 = vmatmul.mubr.f32.gmra.mxu0 %v663
    %v665 = vpop.f32.mrf.mxu0
    %v666 = vadd.f32 %v524, %v665
    %v667 = vpop.f32.mrf.mxu0
    %668 = vmatprep.mubr.f32.mxu0 0.0
    %v669 = vand.u32 %v22, 4294901760
    %v670 = vsub.f32 %v22, %v669
    %v671 = vand.u32 %v670, 4294901760
    %672 = vmatmul.mubr.f32.gmra.mxu0 %v671
    %v673 = vpop.f32.mrf.mxu0
    %v674 = vadd.f32 %v531, %v673
    %v675 = vpop.f32.mrf.mxu0
    %676 = vmatprep.mubr.f32.mxu0 0.0
    %v677 = vand.u32 %v23, 4294901760
    %v678 = vsub.f32 %v23, %v677
    %v679 = vand.u32 %v678, 4294901760
    %680 = vmatmul.mubr.f32.gmra.mxu0 %v679
    %v681 = vpop.f32.mrf.mxu0
    %v682 = vadd.f32 %v538, %v681
    %v683 = vpop.f32.mrf.mxu0
    %684 = vmatprep.mubr.f32.mxu0 0.0
    %v685 = vand.u32 %v24, 4294901760
    %v686 = vsub.f32 %v24, %v685
    %v687 = vand.u32 %v686, 4294901760
    %688 = vmatmul.mubr.f32.gmra.mxu0 %v687
    %v689 = vpop.f32.mrf.mxu0
    %v690 = vadd.f32 %v545, %v689
    %v691 = vpop.f32.mrf.mxu0
    %692 = vdwg.mxu0
    %693 = vmatprep.subr.mxu0 0.0
    %v694 = vand.u32 %v40, 4294901760
    %v695 = vsub.f32 %v40, %v694
    %v696 = vand.u32 %v695, 4294901760
    %697 = vmatpush1.msra.mxu0 %v696
    %698 = vmatprep.subr.mxu0 0.0
    %v699 = vand.u32 %v39, 4294901760
    %v700 = vsub.f32 %v39, %v699
    %v701 = vand.u32 %v700, 4294901760
    %702 = vmatpush1.msra.mxu0 %v701
    %703 = vmatprep.subr.mxu0 0.0
    %v704 = vand.u32 %v38, 4294901760
    %v705 = vsub.f32 %v38, %v704
    %v706 = vand.u32 %v705, 4294901760
    %707 = vmatpush1.msra.mxu0 %v706
    %708 = vmatprep.subr.mxu0 0.0
    %v709 = vand.u32 %v37, 4294901760
    %v710 = vsub.f32 %v37, %v709
    %v711 = vand.u32 %v710, 4294901760
    %712 = vmatpush1.msra.mxu0 %v711
    %713 = vmatprep.subr.mxu0 0.0
    %v714 = vand.u32 %v36, 4294901760
    %v715 = vsub.f32 %v36, %v714
    %v716 = vand.u32 %v715, 4294901760
    %717 = vmatpush1.msra.mxu0 %v716
    %718 = vmatprep.subr.mxu0 0.0
    %v719 = vand.u32 %v35, 4294901760
    %v720 = vsub.f32 %v35, %v719
    %v721 = vand.u32 %v720, 4294901760
    %722 = vmatpush1.msra.mxu0 %v721
    %723 = vmatprep.subr.mxu0 0.0
    %v724 = vand.u32 %v34, 4294901760
    %v725 = vsub.f32 %v34, %v724
    %v726 = vand.u32 %v725, 4294901760
    %727 = vmatpush1.msra.mxu0 %v726
    %728 = vmatprep.subr.mxu0 0.0
    %v729 = vand.u32 %v33, 4294901760
    %v730 = vsub.f32 %v33, %v729
    %v731 = vand.u32 %v730, 4294901760
    %732 = vmatpush1.msra.mxu0 %v731
    %733 = vmatprep.subr.mxu0 0.0
    %v734 = vand.u32 %v32, 4294901760
    %v735 = vsub.f32 %v32, %v734
    %v736 = vand.u32 %v735, 4294901760
    %737 = vmatpush1.msra.mxu0 %v736
    %738 = vmatprep.subr.mxu0 0.0
    %v739 = vand.u32 %v31, 4294901760
    %v740 = vsub.f32 %v31, %v739
    %v741 = vand.u32 %v740, 4294901760
    %742 = vmatpush1.msra.mxu0 %v741
    %743 = vmatprep.subr.mxu0 0.0
    %v744 = vand.u32 %v30, 4294901760
    %v745 = vsub.f32 %v30, %v744
    %v746 = vand.u32 %v745, 4294901760
    %747 = vmatpush1.msra.mxu0 %v746
    %748 = vmatprep.subr.mxu0 0.0
    %v749 = vand.u32 %v29, 4294901760
    %v750 = vsub.f32 %v29, %v749
    %v751 = vand.u32 %v750, 4294901760
    %752 = vmatpush1.msra.mxu0 %v751
    %753 = vmatprep.subr.mxu0 0.0
    %v754 = vand.u32 %v28, 4294901760
    %v755 = vsub.f32 %v28, %v754
    %v756 = vand.u32 %v755, 4294901760
    %757 = vmatpush1.msra.mxu0 %v756
    %758 = vmatprep.subr.mxu0 0.0
    %v759 = vand.u32 %v27, 4294901760
    %v760 = vsub.f32 %v27, %v759
    %v761 = vand.u32 %v760, 4294901760
    %762 = vmatpush1.msra.mxu0 %v761
    %763 = vmatprep.subr.mxu0 0.0
    %v764 = vand.u32 %v26, 4294901760
    %v765 = vsub.f32 %v26, %v764
    %v766 = vand.u32 %v765, 4294901760
    %767 = vmatpush1.msra.mxu0 %v766
    %768 = vmatprep.subr.mxu0 0.0
    %v769 = vand.u32 %v25, 4294901760
    %v770 = vsub.f32 %v25, %v769
    %v771 = vand.u32 %v770, 4294901760
    %772 = vmatpush1.msra.mxu0 %v771
    %773 = vmatprep.subr.mxu0 0.0
    %774 = vmatpush2.msra.mxu0 0.0
    %775 = vmatprep.subr.mxu0 0.0
    %776 = vmatpush2.msra.mxu0 0.0
    %777 = vmatprep.subr.mxu0 0.0
    %778 = vmatpush2.msra.mxu0 0.0
    %779 = vmatprep.subr.mxu0 0.0
    %780 = vmatpush2.msra.mxu0 0.0
    %781 = vmatprep.subr.mxu0 0.0
    %782 = vmatpush2.msra.mxu0 0.0
    %783 = vmatprep.subr.mxu0 0.0
    %784 = vmatpush2.msra.mxu0 0.0
    %785 = vmatprep.subr.mxu0 0.0
    %786 = vmatpush2.msra.mxu0 0.0
    %787 = vmatprep.subr.mxu0 0.0
    %788 = vmatpush2.msra.mxu0 0.0
    %789 = vmatprep.subr.mxu0 0.0
    %790 = vmatpush2.msra.mxu0 0.0
    %791 = vmatprep.subr.mxu0 0.0
    %792 = vmatpush2.msra.mxu0 0.0
    %793 = vmatprep.subr.mxu0 0.0
    %794 = vmatpush2.msra.mxu0 0.0
    %795 = vmatprep.subr.mxu0 0.0
    %796 = vmatpush2.msra.mxu0 0.0
    %797 = vmatprep.subr.mxu0 0.0
    %798 = vmatpush2.msra.mxu0 0.0
    %799 = vmatprep.subr.mxu0 0.0
    %800 = vmatpush2.msra.mxu0 0.0
    %801 = vmatprep.subr.mxu0 0.0
    %802 = vmatpush2.msra.mxu0 0.0
    %803 = vmatprep.subr.mxu0 0.0
    %804 = vmatpush2.msra.mxu0 0.0
    %805 = vmatprep.mubr.f32.mxu0 0.0
    %v806 = vand.u32 %v17, 4294901760
    %807 = vmatmul.mubr.f32.gmra.mxu0 %v806
    %v808 = vpop.f32.mrf.mxu0
    %v809 = vadd.f32 %v634, %v808
    %v810 = vpop.f32.mrf.mxu0
    %811 = vmatprep.mubr.f32.mxu0 0.0
    %v812 = vand.u32 %v18, 4294901760
    %813 = vmatmul.mubr.f32.gmra.mxu0 %v812
    %v814 = vpop.f32.mrf.mxu0
    %v815 = vadd.f32 %v642, %v814
    %v816 = vpop.f32.mrf.mxu0
    %817 = vmatprep.mubr.f32.mxu0 0.0
    %v818 = vand.u32 %v19, 4294901760
    %819 = vmatmul.mubr.f32.gmra.mxu0 %v818
    %v820 = vpop.f32.mrf.mxu0
    %v821 = vadd.f32 %v650, %v820
    %v822 = vpop.f32.mrf.mxu0
    %823 = vmatprep.mubr.f32.mxu0 0.0
    %v824 = vand.u32 %v20, 4294901760
    %825 = vmatmul.mubr.f32.gmra.mxu0 %v824
    %v826 = vpop.f32.mrf.mxu0
    %v827 = vadd.f32 %v658, %v826
    %v828 = vpop.f32.mrf.mxu0
    %829 = vmatprep.mubr.f32.mxu0 0.0
    %v830 = vand.u32 %v21, 4294901760
    %831 = vmatmul.mubr.f32.gmra.mxu0 %v830
    %v832 = vpop.f32.mrf.mxu0
    %v833 = vadd.f32 %v666, %v832
    %v834 = vpop.f32.mrf.mxu0
    %835 = vmatprep.mubr.f32.mxu0 0.0
    %v836 = vand.u32 %v22, 4294901760
    %837 = vmatmul.mubr.f32.gmra.mxu0 %v836
    %v838 = vpop.f32.mrf.mxu0
    %v839 = vadd.f32 %v674, %v838
    %v840 = vpop.f32.mrf.mxu0
    %841 = vmatprep.mubr.f32.mxu0 0.0
    %v842 = vand.u32 %v23, 4294901760
    %843 = vmatmul.mubr.f32.gmra.mxu0 %v842
    %v844 = vpop.f32.mrf.mxu0
    %v845 = vadd.f32 %v682, %v844
    %v846 = vpop.f32.mrf.mxu0
    %847 = vmatprep.mubr.f32.mxu0 0.0
    %v848 = vand.u32 %v24, 4294901760
    %849 = vmatmul.mubr.f32.gmra.mxu0 %v848
    %v850 = vpop.f32.mrf.mxu0
    %v851 = vadd.f32 %v690, %v850
    %v852 = vpop.f32.mrf.mxu0
    %853 = vdwg.mxu0
    %854 = vmatprep.subr.mxu0 0.0
    %v855 = vand.u32 %v40, 4294901760
    %856 = vmatpush1.msra.mxu0 %v855
    %857 = vmatprep.subr.mxu0 0.0
    %v858 = vand.u32 %v39, 4294901760
    %859 = vmatpush1.msra.mxu0 %v858
    %860 = vmatprep.subr.mxu0 0.0
    %v861 = vand.u32 %v38, 4294901760
    %862 = vmatpush1.msra.mxu0 %v861
    %863 = vmatprep.subr.mxu0 0.0
    %v864 = vand.u32 %v37, 4294901760
    %865 = vmatpush1.msra.mxu0 %v864
    %866 = vmatprep.subr.mxu0 0.0
    %v867 = vand.u32 %v36, 4294901760
    %868 = vmatpush1.msra.mxu0 %v867
    %869 = vmatprep.subr.mxu0 0.0
    %v870 = vand.u32 %v35, 4294901760
    %871 = vmatpush1.msra.mxu0 %v870
    %872 = vmatprep.subr.mxu0 0.0
    %v873 = vand.u32 %v34, 4294901760
    %874 = vmatpush1.msra.mxu0 %v873
    %875 = vmatprep.subr.mxu0 0.0
    %v876 = vand.u32 %v33, 4294901760
    %877 = vmatpush1.msra.mxu0 %v876
    %878 = vmatprep.subr.mxu0 0.0
    %v879 = vand.u32 %v32, 4294901760
    %880 = vmatpush1.msra.mxu0 %v879
    %881 = vmatprep.subr.mxu0 0.0
    %v882 = vand.u32 %v31, 4294901760
    %883 = vmatpush1.msra.mxu0 %v882
    %884 = vmatprep.subr.mxu0 0.0
    %v885 = vand.u32 %v30, 4294901760
    %886 = vmatpush1.msra.mxu0 %v885
    %887 = vmatprep.subr.mxu0 0.0
    %v888 = vand.u32 %v29, 4294901760
    %889 = vmatpush1.msra.mxu0 %v888
    %890 = vmatprep.subr.mxu0 0.0
    %v891 = vand.u32 %v28, 4294901760
    %892 = vmatpush1.msra.mxu0 %v891
    %893 = vmatprep.subr.mxu0 0.0
    %v894 = vand.u32 %v27, 4294901760
    %895 = vmatpush1.msra.mxu0 %v894
    %896 = vmatprep.subr.mxu0 0.0
    %v897 = vand.u32 %v26, 4294901760
    %898 = vmatpush1.msra.mxu0 %v897
    %899 = vmatprep.subr.mxu0 0.0
    %v900 = vand.u32 %v25, 4294901760
    %901 = vmatpush1.msra.mxu0 %v900
    %902 = vmatprep.subr.mxu0 0.0
    %903 = vmatpush2.msra.mxu0 0.0
    %904 = vmatprep.subr.mxu0 0.0
    %905 = vmatpush2.msra.mxu0 0.0
    %906 = vmatprep.subr.mxu0 0.0
    %907 = vmatpush2.msra.mxu0 0.0
    %908 = vmatprep.subr.mxu0 0.0
    %909 = vmatpush2.msra.mxu0 0.0
    %910 = vmatprep.subr.mxu0 0.0
    %911 = vmatpush2.msra.mxu0 0.0
    %912 = vmatprep.subr.mxu0 0.0
    %913 = vmatpush2.msra.mxu0 0.0
    %914 = vmatprep.subr.mxu0 0.0
    %915 = vmatpush2.msra.mxu0 0.0
    %916 = vmatprep.subr.mxu0 0.0
    %917 = vmatpush2.msra.mxu0 0.0
    %918 = vmatprep.subr.mxu0 0.0
    %919 = vmatpush2.msra.mxu0 0.0
    %920 = vmatprep.subr.mxu0 0.0
    %921 = vmatpush2.msra.mxu0 0.0
    %922 = vmatprep.subr.mxu0 0.0
    %923 = vmatpush2.msra.mxu0 0.0
    %924 = vmatprep.subr.mxu0 0.0
    %925 = vmatpush2.msra.mxu0 0.0
    %926 = vmatprep.subr.mxu0 0.0
    %927 = vmatpush2.msra.mxu0 0.0
    %928 = vmatprep.subr.mxu0 0.0
    %929 = vmatpush2.msra.mxu0 0.0
    %930 = vmatprep.subr.mxu0 0.0
    %931 = vmatpush2.msra.mxu0 0.0
    %932 = vmatprep.subr.mxu0 0.0
    %933 = vmatpush2.msra.mxu0 0.0
    %934 = vmatprep.mubr.f32.mxu0 0.0
    %v935 = vand.u32 %v17, 4294901760
    %936 = vmatmul.mubr.f32.gmra.mxu0 %v935
    %v937 = vpop.f32.mrf.mxu0
    %v938 = vadd.f32 %v809, %v937
    %v939 = vpop.f32.mrf.mxu0
    %940 = vmatprep.mubr.f32.mxu0 0.0
    %v941 = vand.u32 %v18, 4294901760
    %942 = vmatmul.mubr.f32.gmra.mxu0 %v941
    %v943 = vpop.f32.mrf.mxu0
    %v944 = vadd.f32 %v815, %v943
    %v945 = vpop.f32.mrf.mxu0
    %946 = vmatprep.mubr.f32.mxu0 0.0
    %v947 = vand.u32 %v19, 4294901760
    %948 = vmatmul.mubr.f32.gmra.mxu0 %v947
    %v949 = vpop.f32.mrf.mxu0
    %v950 = vadd.f32 %v821, %v949
    %v951 = vpop.f32.mrf.mxu0
    %952 = vmatprep.mubr.f32.mxu0 0.0
    %v953 = vand.u32 %v20, 4294901760
    %954 = vmatmul.mubr.f32.gmra.mxu0 %v953
    %v955 = vpop.f32.mrf.mxu0
    %v956 = vadd.f32 %v827, %v955
    %v957 = vpop.f32.mrf.mxu0
    %958 = vmatprep.mubr.f32.mxu0 0.0
    %v959 = vand.u32 %v21, 4294901760
    %960 = vmatmul.mubr.f32.gmra.mxu0 %v959
    %v961 = vpop.f32.mrf.mxu0
    %v962 = vadd.f32 %v833, %v961
    %v963 = vpop.f32.mrf.mxu0
    %964 = vmatprep.mubr.f32.mxu0 0.0
    %v965 = vand.u32 %v22, 4294901760
    %966 = vmatmul.mubr.f32.gmra.mxu0 %v965
    %v967 = vpop.f32.mrf.mxu0
    %v968 = vadd.f32 %v839, %v967
    %v969 = vpop.f32.mrf.mxu0
    %970 = vmatprep.mubr.f32.mxu0 0.0
    %v971 = vand.u32 %v23, 4294901760
    %972 = vmatmul.mubr.f32.gmra.mxu0 %v971
    %v973 = vpop.f32.mrf.mxu0
    %v974 = vadd.f32 %v845, %v973
    %v975 = vpop.f32.mrf.mxu0
    %976 = vmatprep.mubr.f32.mxu0 0.0
    %v977 = vand.u32 %v24, 4294901760
    %978 = vmatmul.mubr.f32.gmra.mxu0 %v977
    %v979 = vpop.f32.mrf.mxu0
    %v980 = vadd.f32 %v851, %v979
    %v981 = vpop.f32.mrf.mxu0
    %982 = vdwg.mxu0
    %v983 = vld [vmem:[%s2] sm:$0xff]
    %v984 = vld [vmem:[%s2 + $0x8] sm:$0xff]
    %v985 = vadd.f32 %v938, %v983
    %v986 = vadd.f32 %v944, %v984
    %v987 = vadd.f32 %v950, %v983
    %v988 = vadd.f32 %v956, %v984
    %v989 = vadd.f32 %v962, %v983
    %v990 = vadd.f32 %v968, %v984
    %v991 = vadd.f32 %v974, %v983
    %v992 = vadd.f32 %v980, %v984
    %v993 = vtanh.pop %v985
    %v994 = vtanh.pop %v986
    %v995 = vtanh.pop %v987
    %v996 = vtanh.pop %v988
    %v997 = vtanh.pop %v989
    %v998 = vtanh.pop %v990
    %v999 = vtanh.pop %v991
    %v1000 = vtanh.pop %v992
    %v1001 = vmul.f32 %v993, 1.442695
    %v1002 = vpow.pop %v1001
    %v1003 = vmul.f32 %v994, 1.442695
    %v1004 = vpow.pop %v1003
    %v1005 = vmul.f32 %v995, 1.442695
    %v1006 = vpow.pop %v1005
    %v1007 = vmul.f32 %v996, 1.442695
    %v1008 = vpow.pop %v1007
    %v1009 = vmul.f32 %v997, 1.442695
    %v1010 = vpow.pop %v1009
    %v1011 = vmul.f32 %v998, 1.442695
    %v1012 = vpow.pop %v1011
    %v1013 = vmul.f32 %v999, 1.442695
    %v1014 = vpow.pop %v1013
    %v1015 = vmul.f32 %v1000, 1.442695
    %v1016 = vpow.pop %v1015
    %vm1017 = vcmask 7168
    %v1018 = vsel %vm1017, %v1002, 0.0
    %v1019 = vsel %vm1017, %v1004, 0.0
    %v1020 = vadd.f32 %v1018, %v1019
    %v1021 = vrot.slane %v1020, 4
    %v1022 = vadd.f32 %v1020, %v1021
    %v1023 = vrot.slane %v1022, 2
    %v1024 = vadd.f32 %v1022, %v1023
    %v1025 = vrot.slane %v1024, 1
    %v1026 = vadd.f32 %v1024, %v1025
    %v1027 = vsel %vm1017, %v1006, 0.0
    %v1028 = vsel %vm1017, %v1008, 0.0
    %v1029 = vadd.f32 %v1027, %v1028
    %v1030 = vrot.slane %v1029, 4
    %v1031 = vadd.f32 %v1029, %v1030
    %v1032 = vrot.slane %v1031, 2
    %v1033 = vadd.f32 %v1031, %v1032
    %v1034 = vrot.slane %v1033, 1
    %v1035 = vadd.f32 %v1033, %v1034
    %v1036 = vsel %vm1017, %v1010, 0.0
    %v1037 = vsel %vm1017, %v1012, 0.0
    %v1038 = vadd.f32 %v1036, %v1037
    %v1039 = vrot.slane %v1038, 4
    %v1040 = vadd.f32 %v1038, %v1039
    %v1041 = vrot.slane %v1040, 2
    %v1042 = vadd.f32 %v1040, %v1041
    %v1043 = vrot.slane %v1042, 1
    %v1044 = vadd.f32 %v1042, %v1043
    %v1045 = vsel %vm1017, %v1014, 0.0
    %v1046 = vsel %vm1017, %v1016, 0.0
    %v1047 = vadd.f32 %v1045, %v1046
    %v1048 = vrot.slane %v1047, 4
    %v1049 = vadd.f32 %v1047, %v1048
    %v1050 = vrot.slane %v1049, 2
    %v1051 = vadd.f32 %v1049, %v1050
    %v1052 = vrot.slane %v1051, 1
    %v1053 = vadd.f32 %v1051, %v1052
    %v1054 = vrcp.pop %v1026
    %v1055 = vmul.f32 %v1002, %v1054
    %v1056 = vmul.f32 %v1004, %v1054
    %v1057 = vrcp.pop %v1035
    %v1058 = vmul.f32 %v1006, %v1057
    %v1059 = vmul.f32 %v1008, %v1057
    %v1060 = vrcp.pop %v1044
    %v1061 = vmul.f32 %v1010, %v1060
    %v1062 = vmul.f32 %v1012, %v1060
    %v1063 = vrcp.pop %v1053
    %v1064 = vmul.f32 %v1014, %v1063
    %v1065 = vmul.f32 %v1016, %v1063
    %v1066 = vadd.f32 %v1055, 1e-10
    %v1067 = vadd.f32 %v1056, 1e-10
    %v1068 = vadd.f32 %v1058, 1e-10
    %v1069 = vadd.f32 %v1059, 1e-10
    %v1070 = vadd.f32 %v1061, 1e-10
    %v1071 = vadd.f32 %v1062, 1e-10
    %v1072 = vadd.f32 %v1064, 1e-10
    %v1073 = vadd.f32 %v1065, 1e-10
    %1075 = vset.pattern.permute.xlu0 0
    %1076 = vperm.xlu0 %1075, %v1066
    %v1077 = vpop.permute.xlu0 %1076
    %1080 = vset.pattern.permute.xlu0 0
    %1081 = vperm.xlu0 %1080, %v1067
    %v1082 = vpop.permute.xlu0 %1081
    %1085 = vset.pattern.permute.xlu0 0
    %1086 = vperm.xlu0 %1085, %v1068
    %v1087 = vpop.permute.xlu0 %1086
    %1090 = vset.pattern.permute.xlu0 0
    %1091 = vperm.xlu0 %1090, %v1069
    %v1092 = vpop.permute.xlu0 %1091
    %1095 = vset.pattern.permute.xlu0 0
    %1096 = vperm.xlu0 %1095, %v1070
    %v1097 = vpop.permute.xlu0 %1096
    %1100 = vset.pattern.permute.xlu0 0
    %1101 = vperm.xlu0 %1100, %v1071
    %v1102 = vpop.permute.xlu0 %1101
    %1105 = vset.pattern.permute.xlu0 0
    %1106 = vperm.xlu0 %1105, %v1072
    %v1107 = vpop.permute.xlu0 %1106
    %1110 = vset.pattern.permute.xlu0 0
    %1111 = vperm.xlu0 %1110, %v1073
    %v1112 = vpop.permute.xlu0 %1111
    %v1114 = vmul.f32 %v17, %v1077
    %v1115 = vmul.f32 %v18, %v1082
    %v1116 = vmul.f32 %v19, %v1087
    %v1117 = vmul.f32 %v20, %v1092
    %v1118 = vmul.f32 %v21, %v1097
    %v1119 = vmul.f32 %v22, %v1102
    %v1120 = vmul.f32 %v23, %v1107
    %v1121 = vmul.f32 %v24, %v1112
    %v1122 = vadd.f32 %v1114, %v1115
    %v1123 = vrot.slane %v1122, 4
    %v1124 = vadd.f32 %v1122, %v1123
    %v1125 = vrot.slane %v1124, 2
    %v1126 = vadd.f32 %v1124, %v1125
    %v1127 = vrot.slane %v1126, 1
    %v1128 = vadd.f32 %v1126, %v1127
    %v1129 = vadd.f32 %v1116, %v1117
    %v1130 = vrot.slane %v1129, 4
    %v1131 = vadd.f32 %v1129, %v1130
    %v1132 = vrot.slane %v1131, 2
    %v1133 = vadd.f32 %v1131, %v1132
    %v1134 = vrot.slane %v1133, 1
    %v1135 = vadd.f32 %v1133, %v1134
    %v1136 = vadd.f32 %v1118, %v1119
    %v1137 = vrot.slane %v1136, 4
    %v1138 = vadd.f32 %v1136, %v1137
    %v1139 = vrot.slane %v1138, 2
    %v1140 = vadd.f32 %v1138, %v1139
    %v1141 = vrot.slane %v1140, 1
    %v1142 = vadd.f32 %v1140, %v1141
    %v1143 = vadd.f32 %v1120, %v1121
    %v1144 = vrot.slane %v1143, 4
    %v1145 = vadd.f32 %v1143, %v1144
    %v1146 = vrot.slane %v1145, 2
    %v1147 = vadd.f32 %v1145, %v1146
    %v1148 = vrot.slane %v1147, 1
    %v1149 = vadd.f32 %v1147, %v1148
    %vm1154 = vcmask 1041409
    %v1155 = vsel %vm1154, %v1135, %v1128
    %vm1156 = vcmask 1042434
    %v1157 = vsel %vm1156, %v1142, %v1155
    %vm1158 = vcmask 1043459
    %v1159 = vsel %vm1158, %v1149, %v1157
    %1161 = vst [vmem:[#allocation2] sm:$0xf] %v1159
    %1162 = vst.msk [vmem:[%s4] sm:$0xff] %vm1017, %v1066
    %1163 = vst.msk [vmem:[%s4 + $0x8] sm:$0xff] %vm1017, %v1067
    %1164 = vst.msk [vmem:[%s4 + $0x10] sm:$0xff] %vm1017, %v1068
    %1165 = vst.msk [vmem:[%s4 + $0x18] sm:$0xff] %vm1017, %v1069
    %1166 = vst.msk [vmem:[%s4 + $0x20] sm:$0xff] %vm1017, %v1070
    %1167 = vst.msk [vmem:[%s4 + $0x28] sm:$0xff] %vm1017, %v1071
    %1168 = vst.msk [vmem:[%s4 + $0x30] sm:$0xff] %vm1017, %v1072
    %1169 = vst.msk [vmem:[%s4 + $0x38] sm:$0xff] %vm1017, %v1073
    // Predicated region
    $region14: #{tpu_custom_call.1} parent=1 // pred_check
      _
    $region15: #{tpu_custom_call.1} parent=1 // pred_check_branch
      %1171 = sbr.rel (0) target = $region17
    $region16: #{tpu_custom_call.1} parent=1 // pred_region
      %s1173 = ssub.s32 64, 64
      %1174 = vsyncadd [#allocation3], %s1173
      %s1176 = sshll.u32 [#allocation2], 4
      %s1177 = int_to_ptr.vmem [resolvable:$true] %s1176
      %1179 = dma.vmem_to_hbm [thread:$0]  %s1177, 64, %s3, [#allocation3]
    $region17: #{tpu_custom_call.1} parent=1 // pred_fallthru
      _
    // Predicated region
    $region18: #{tpu_custom_call.1} parent=1 // pred_check
      _
    $region19: #{tpu_custom_call.1} parent=1 // pred_check_branch
      %1181 = sbr.rel (0) target = $region21
    $region20: #{tpu_custom_call.1} parent=1 // pred_region
      _
    $region21: #{tpu_custom_call.1} parent=1 // pred_fallthru
      _
    // Predicated region
    $region22: #{tpu_custom_call.1} parent=1 // pred_check
      _
    $region23: #{tpu_custom_call.1} parent=1 // pred_check_branch
      %1183 = sbr.rel (0) target = $region25
    $region24: #{tpu_custom_call.1} parent=1 // pred_region
      %1184 = dma.done [#allocation3], 64
    $region25: #{tpu_custom_call.1} parent=1 // pred_fallthru
      _
    // Predicated region
    $region26: #{tpu_custom_call.1} parent=1 // pred_check
      _
    $region27: #{tpu_custom_call.1} parent=1 // pred_check_branch
      %1186 = sbr.rel (0) target = $region29
    $region28: #{tpu_custom_call.1} parent=1 // pred_region
      _
    $region29: #{tpu_custom_call.1} parent=1 // pred_fallthru
      _
    %1187 = vsyncpa [#allocation3], 1

</llo_original>
